<compile_context>
chip_gen: v7x
topology: tpu7x:2x2x1
jax: 0.10.0
libtpu: 0.0.40
codegen_flags: <defaults>
</compile_context>

<pallas_src>
import jax
import jax.numpy as jnp
from jax.experimental import pallas as pl
from jax.experimental.pallas import tpu as pltpu


def _make_kernel(BT, T, CP, TPR, KSZ, PAD):
    # Rows fed to each matmul: multiple of 8, covers every batch's T outputs
    # (out row for batch j, time t lives at acc row j*TPR + t), and k+R stays
    # inside the BT*TPR-row scratch for every tap shift k < KSZ.
    R = BT * TPR - 8

    def kernel(x_ref, mask_ref, w1_ref, b1_ref, w2_ref, b2_ref, out_ref, pad_buf):
        # pad_buf: (BT*TPR, CP) f32 scratch.  Batch j owns rows
        # [j*TPR, (j+1)*TPR); its conv input sits at [j*TPR+PAD, j*TPR+PAD+T)
        # and the surrounding rows are zero halos (so taps never leak across
        # batch boundaries).

        def conv(w_ref, b_ref):
            # im2col over the whole flattened buffer -> one deep matmul.
            taps = [pad_buf[k:k + R, :].astype(jnp.bfloat16) for k in range(KSZ)]
            xcat = jnp.concatenate(taps, axis=-1)               # (R, KSZ*CP) bf16
            return jnp.dot(xcat, w_ref[...],
                           preferred_element_type=jnp.float32) + b_ref[...]

        # ---- conv1 input: x * mel_mask (halos re-zeroed every step; tiny) ----
        for j in range(BT):
            base = j * TPR
            pad_buf[base:base + PAD, :] = jnp.zeros((PAD, CP), jnp.float32)
            pad_buf[base + PAD + T:base + TPR, :] = jnp.zeros(
                (TPR - PAD - T, CP), jnp.float32)
            pad_buf[base + PAD:base + PAD + T, :] = x_ref[j] * mask_ref[j]

        h1 = conv(w1_ref, b1_ref)                               # (R, CP) f32

        # ---- conv2 input: conv1(...) * mel_mask ----
        for j in range(BT):
            base = j * TPR
            pad_buf[base + PAD:base + PAD + T, :] = h1[base:base + T, :] * mask_ref[j]

        h2 = conv(w2_ref, b2_ref)                               # (R, CP) f32

        # ---- final mask and writeback ----
        for j in range(BT):
            base = j * TPR
            out_ref[j] = (h2[base:base + T, :] * mask_ref[j]).astype(out_ref.dtype)

    return kernel


def plm_conv(x_ncw, mel_mask, w1, b1, w2, b2):
    """x_ncw: (B, C, T), mel_mask: (B, 1, T) -- PyTorch NCW convention."""
    B, C, T = x_ncw.shape
    KSZ = w1.shape[-1]
    PAD = (KSZ - 1) // 2
    CP = max(128, ((C + 127) // 128) * 128)          # lane-dense channel pad
    TPR = ((T + 7) // 8) * 8 + 8                     # per-sequence scratch rows
                                                     # (mult of 8, >= T + 2*PAD)

    # Pack several batch elements per grid step so the matmul M dim is >= ~256
    # rows even for short sequences; BT must divide B (no ragged blocks).
    BT = max(1, min(B, -(-256 // max(T, 1))))
    while B % BT:
        BT -= 1
    grid = (B // BT,)

    x = jnp.transpose(x_ncw, (0, 2, 1)).astype(jnp.float32)        # (B, T, C)
    x = jnp.pad(x, ((0, 0), (0, 0), (0, CP - C)))                  # (B, T, CP)
    mask = jnp.transpose(mel_mask, (0, 2, 1)).astype(jnp.float32)  # (B, T, 1)

    def prep_w(w):
        # (Cout, Cin, K) -> (K, Cin, Cout) -> zero-pad channels -> (K*CP, CP) bf16
        wk = jnp.transpose(w, (2, 1, 0)).astype(jnp.float32)
        wp = jnp.zeros((KSZ, CP, CP), jnp.float32).at[:, :C, :C].set(wk)
        return wp.reshape(KSZ * CP, CP).astype(jnp.bfloat16)

    def prep_b(b):
        return jnp.zeros((1, CP), jnp.float32).at[:, :C].set(b.astype(jnp.float32))

    w1k, w2k = prep_w(w1), prep_w(w2)
    b1r, b2r = prep_b(b1), prep_b(b2)

    kernel = _make_kernel(BT, T, CP, TPR, KSZ, PAD)

    out = pl.pallas_call(
        kernel,
        out_shape=jax.ShapeDtypeStruct((B, T, CP), jnp.float32),
        grid=grid,
        in_specs=[
            pl.BlockSpec((BT, T, CP), lambda i: (i, 0, 0)),    # x     (per-block tile)
            pl.BlockSpec((BT, T, 1), lambda i: (i, 0, 0)),     # mask  (per-block tile)
            pl.BlockSpec((KSZ * CP, CP), lambda i: (0, 0)),    # w1    (VMEM resident)
            pl.BlockSpec((1, CP), lambda i: (0, 0)),           # b1    (resident)
            pl.BlockSpec((KSZ * CP, CP), lambda i: (0, 0)),    # w2    (resident)
            pl.BlockSpec((1, CP), lambda i: (0, 0)),           # b2    (resident)
        ],
        out_specs=pl.BlockSpec((BT, T, CP), lambda i: (i, 0, 0)),
        scratch_shapes=[pltpu.VMEM((BT * TPR, CP), jnp.float32)],
        compiler_params=pltpu.CompilerParams(
            dimension_semantics=("parallel",),       # megacore on v7x; no-op v5e/v6e
            vmem_limit_bytes=40 * 1024 * 1024,       # > v5e/v6e defaults, < v7x 64MiB
        ),
    )(x, mask, w1k, b1r, w2k, b2r)

    return jnp.transpose(out[:, :, :C], (0, 2, 1))               # back to (B, C, T)


def plm_conv_ref(x, mask, w1, b1, w2, b2, pad=2):
    """Pure-JAX f32 reference mirroring the PyTorch forward (NCW)."""
    def conv(h, w, b):
        y = jax.lax.conv_general_dilated(
            h, w, window_strides=(1,), padding=((pad, pad),),
            dimension_numbers=("NCH", "OIH", "NCH"))
        return y + b[None, :, None]
    h = conv(x * mask, w1, b1)
    h = conv(h * mask, w2, b2)
    return h * mask


if __name__ == "__main__":
    B, C, T = 2, 80, 16  # hidden_channels=80 (module default), small T for test
    K = 5

    key = jax.random.PRNGKey(0)
    k_x, k_w1, k_b1, k_w2, k_b2 = jax.random.split(key, 5)

    # Deterministic parameter init (PyTorch-like uniform(-1/sqrt(C*K), +)).
    bound = 1.0 / jnp.sqrt(jnp.float32(C * K))
    w1 = jax.random.uniform(k_w1, (C, C, K), jnp.float32, -bound, bound)
    b1 = jax.random.uniform(k_b1, (C,), jnp.float32, -bound, bound)
    w2 = jax.random.uniform(k_w2, (C, C, K), jnp.float32, -bound, bound)
    b2 = jax.random.uniform(k_b2, (C,), jnp.float32, -bound, bound)

    x = jax.random.normal(k_x, (B, C, T), jnp.float32)
    lengths = jnp.array([T, 10], dtype=jnp.int32)
    mel_mask = (jnp.arange(T)[None, :] < lengths[:, None]).astype(
        jnp.float32)[:, None, :]                                   # (B, 1, T)

    out = plm_conv(x, mel_mask, w1, b1, w2, b2)
    out = jax.block_until_ready(out)

    ref = plm_conv_ref(x, mel_mask, w1, b1, w2, b2, pad=2)
    assert out.shape == (B, C, T)
    max_err = float(jnp.max(jnp.abs(out - ref)))
    # bf16 MXU operands with f32 accumulation: loose tolerance vs. the f32 ref.
    assert jnp.allclose(out, ref, rtol=3e-2, atol=3e-2), max_err

    print("KERNEL_OK")
</pallas_src>

<mosaic_0001>
module attributes {stable_mosaic.version = 11 : i64} {
  func.func @kernel(%arg0: i32, %arg1: memref<2x16x128xf32, #tpu.memory_space<vmem>>, %arg2: memref<2x16x1xf32, #tpu.memory_space<vmem>>, %arg3: memref<640x128xbf16, #tpu.memory_space<vmem>>, %arg4: memref<1x128xf32, #tpu.memory_space<vmem>>, %arg5: memref<640x128xbf16, #tpu.memory_space<vmem>>, %arg6: memref<1x128xf32, #tpu.memory_space<vmem>>, %arg7: memref<2x16x128xf32, #tpu.memory_space<vmem>>, %arg8: memref<48x128xf32, #tpu.memory_space<vmem>>) attributes {dimension_semantics = [#tpu.dimension_semantics<parallel>], iteration_bounds = array<i64: 1>, scalar_prefetch = 0 : i64, scratch_operands = 1 : i64, tpu.core_type = #tpu.core_type<tc>, window_params = [{transform_indices = @transform_0, window_bounds = array<i64: 2, 16, 128>}, {transform_indices = @transform_1, window_bounds = array<i64: 2, 16, 1>}, {pipeline_mode = #tpu.pipeline_mode<synchronous>, transform_indices = @transform_2, window_bounds = array<i64: 640, 128>}, {pipeline_mode = #tpu.pipeline_mode<synchronous>, transform_indices = @transform_3, window_bounds = array<i64: 1, 128>}, {pipeline_mode = #tpu.pipeline_mode<synchronous>, transform_indices = @transform_4, window_bounds = array<i64: 640, 128>}, {pipeline_mode = #tpu.pipeline_mode<synchronous>, transform_indices = @transform_5, window_bounds = array<i64: 1, 128>}, {transform_indices = @transform_6, window_bounds = array<i64: 2, 16, 128>}]} {
    %cst = arith.constant 0.000000e+00 : f32
    %0 = vector.broadcast %cst : f32 to vector<2x128xf32>
    %c0 = arith.constant 0 : index
    %c0_0 = arith.constant 0 : index
    %1 = vector.load %arg8[%c0, %c0_0] : memref<48x128xf32, #tpu.memory_space<vmem>>, vector<2x128xf32>
    tpu.vector_store %arg8[%c0, %c0_0], %0 {strides = array<i32>} : memref<48x128xf32, #tpu.memory_space<vmem>>, vector<2x128xf32>,
    %cst_1 = arith.constant 0.000000e+00 : f32
    %2 = vector.broadcast %cst_1 : f32 to vector<6x128xf32>
    %c18 = arith.constant 18 : index
    %c0_2 = arith.constant 0 : index
    %3 = vector.load %arg8[%c18, %c0_2] : memref<48x128xf32, #tpu.memory_space<vmem>>, vector<6x128xf32>
    tpu.vector_store %arg8[%c18, %c0_2], %2 {strides = array<i32>} : memref<48x128xf32, #tpu.memory_space<vmem>>, vector<6x128xf32>,
    %c0_3 = arith.constant 0 : index
    %c0_4 = arith.constant 0 : index
    %c0_5 = arith.constant 0 : index
    %4 = vector.load %arg1[%c0_3, %c0_4, %c0_5] : memref<2x16x128xf32, #tpu.memory_space<vmem>>, vector<1x16x128xf32>
    %5 = vector.shape_cast %4 : vector<1x16x128xf32> to vector<16x128xf32>
    %c0_6 = arith.constant 0 : index
    %c0_7 = arith.constant 0 : index
    %c0_8 = arith.constant 0 : index
    %6 = vector.load %arg2[%c0_6, %c0_7, %c0_8] : memref<2x16x1xf32, #tpu.memory_space<vmem>>, vector<1x16x1xf32>
    %7 = vector.shape_cast %6 : vector<1x16x1xf32> to vector<16x1xf32>
    %8 = vector.broadcast %7 : vector<16x1xf32> to vector<16x128xf32>
    %9 = arith.mulf %5, %8 : vector<16x128xf32>
    %c2 = arith.constant 2 : index
    %c0_9 = arith.constant 0 : index
    %10 = vector.load %arg8[%c2, %c0_9] : memref<48x128xf32, #tpu.memory_space<vmem>>, vector<16x128xf32>
    tpu.vector_store %arg8[%c2, %c0_9], %9 {strides = array<i32>} : memref<48x128xf32, #tpu.memory_space<vmem>>, vector<16x128xf32>,
    %cst_10 = arith.constant 0.000000e+00 : f32
    %11 = vector.broadcast %cst_10 : f32 to vector<2x128xf32>
    %c24 = arith.constant 24 : index
    %c0_11 = arith.constant 0 : index
    %12 = vector.load %arg8[%c24, %c0_11] : memref<48x128xf32, #tpu.memory_space<vmem>>, vector<2x128xf32>
    tpu.vector_store %arg8[%c24, %c0_11], %11 {strides = array<i32>} : memref<48x128xf32, #tpu.memory_space<vmem>>, vector<2x128xf32>,
    %cst_12 = arith.constant 0.000000e+00 : f32
    %13 = vector.broadcast %cst_12 : f32 to vector<6x128xf32>
    %c42 = arith.constant 42 : index
    %c0_13 = arith.constant 0 : index
    %14 = vector.load %arg8[%c42, %c0_13] : memref<48x128xf32, #tpu.memory_space<vmem>>, vector<6x128xf32>
    tpu.vector_store %arg8[%c42, %c0_13], %13 {strides = array<i32>} : memref<48x128xf32, #tpu.memory_space<vmem>>, vector<6x128xf32>,
    %c1 = arith.constant 1 : index
    %c0_14 = arith.constant 0 : index
    %c0_15 = arith.constant 0 : index
    %15 = vector.load %arg1[%c1, %c0_14, %c0_15] : memref<2x16x128xf32, #tpu.memory_space<vmem>>, vector<1x16x128xf32>
    %16 = vector.shape_cast %15 : vector<1x16x128xf32> to vector<16x128xf32>
    %c1_16 = arith.constant 1 : index
    %c0_17 = arith.constant 0 : index
    %c0_18 = arith.constant 0 : index
    %17 = vector.load %arg2[%c1_16, %c0_17, %c0_18] : memref<2x16x1xf32, #tpu.memory_space<vmem>>, vector<1x16x1xf32>
    %18 = vector.shape_cast %17 : vector<1x16x1xf32> to vector<16x1xf32>
    %19 = vector.broadcast %18 : vector<16x1xf32> to vector<16x128xf32>
    %20 = arith.mulf %16, %19 : vector<16x128xf32>
    %c26 = arith.constant 26 : index
    %c0_19 = arith.constant 0 : index
    %21 = vector.load %arg8[%c26, %c0_19] : memref<48x128xf32, #tpu.memory_space<vmem>>, vector<16x128xf32>
    tpu.vector_store %arg8[%c26, %c0_19], %20 {strides = array<i32>} : memref<48x128xf32, #tpu.memory_space<vmem>>, vector<16x128xf32>,
    %c0_20 = arith.constant 0 : index
    %c0_21 = arith.constant 0 : index
    %22 = vector.load %arg8[%c0_20, %c0_21] : memref<48x128xf32, #tpu.memory_space<vmem>>, vector<40x128xf32>
    %23 = arith.truncf %22 : vector<40x128xf32> to vector<40x128xbf16>
    %c1_22 = arith.constant 1 : index
    %c0_23 = arith.constant 0 : index
    %24 = vector.load %arg8[%c1_22, %c0_23] : memref<48x128xf32, #tpu.memory_space<vmem>>, vector<40x128xf32>
    %25 = arith.truncf %24 : vector<40x128xf32> to vector<40x128xbf16>
    %c2_24 = arith.constant 2 : index
    %c0_25 = arith.constant 0 : index
    %26 = vector.load %arg8[%c2_24, %c0_25] : memref<48x128xf32, #tpu.memory_space<vmem>>, vector<40x128xf32>
    %27 = arith.truncf %26 : vector<40x128xf32> to vector<40x128xbf16>
    %c3 = arith.constant 3 : index
    %c0_26 = arith.constant 0 : index
    %28 = vector.load %arg8[%c3, %c0_26] : memref<48x128xf32, #tpu.memory_space<vmem>>, vector<40x128xf32>
    %29 = arith.truncf %28 : vector<40x128xf32> to vector<40x128xbf16>
    %c4 = arith.constant 4 : index
    %c0_27 = arith.constant 0 : index
    %30 = vector.load %arg8[%c4, %c0_27] : memref<48x128xf32, #tpu.memory_space<vmem>>, vector<40x128xf32>
    %31 = arith.truncf %30 : vector<40x128xf32> to vector<40x128xbf16>
    %32 = tpu.concatenate %23, %25, %27, %29, %31 in 1 : vector<40x128xbf16>, vector<40x128xbf16>, vector<40x128xbf16>, vector<40x128xbf16>, vector<40x128xbf16> -> vector<40x640xbf16>
    %c0_28 = arith.constant 0 : index
    %c0_29 = arith.constant 0 : index
    %33 = vector.load %arg3[%c0_28, %c0_29] : memref<640x128xbf16, #tpu.memory_space<vmem>>, vector<640x128xbf16>
    %cst_30 = arith.constant dense<0.000000e+00> : vector<40x128xf32>
    %34 = tpu.matmul %32, %33, %cst_30 {dimension_numbers = #tpu.dot_dimension_numbers<[1], [0], [0], [1], [0, 0, 1, 1], [], []>} : vector<40x640xbf16>, vector<640x128xbf16>, vector<40x128xf32> -> vector<40x128xf32>
    %c0_31 = arith.constant 0 : index
    %c0_32 = arith.constant 0 : index
    %35 = vector.load %arg4[%c0_31, %c0_32] : memref<1x128xf32, #tpu.memory_space<vmem>>, vector<1x128xf32>
    %36 = vector.broadcast %35 : vector<1x128xf32> to vector<40x128xf32>
    %37 = arith.addf %34, %36 : vector<40x128xf32>
    %38 = vector.extract_strided_slice %37 {offsets = [0, 0], sizes = [16, 128], strides = [1, 1]} : vector<40x128xf32> to vector<16x128xf32>
    %c0_33 = arith.constant 0 : index
    %c0_34 = arith.constant 0 : index
    %c0_35 = arith.constant 0 : index
    %39 = vector.load %arg2[%c0_33, %c0_34, %c0_35] : memref<2x16x1xf32, #tpu.memory_space<vmem>>, vector<1x16x1xf32>
    %40 = vector.shape_cast %39 : vector<1x16x1xf32> to vector<16x1xf32>
    %41 = vector.broadcast %40 : vector<16x1xf32> to vector<16x128xf32>
    %42 = arith.mulf %38, %41 : vector<16x128xf32>
    %c2_36 = arith.constant 2 : index
    %c0_37 = arith.constant 0 : index
    %43 = vector.load %arg8[%c2_36, %c0_37] : memref<48x128xf32, #tpu.memory_space<vmem>>, vector<16x128xf32>
    tpu.vector_store %arg8[%c2_36, %c0_37], %42 {strides = array<i32>} : memref<48x128xf32, #tpu.memory_space<vmem>>, vector<16x128xf32>,
    %44 = vector.extract_strided_slice %37 {offsets = [24, 0], sizes = [16, 128], strides = [1, 1]} : vector<40x128xf32> to vector<16x128xf32>
    %c1_38 = arith.constant 1 : index
    %c0_39 = arith.constant 0 : index
    %c0_40 = arith.constant 0 : index
    %45 = vector.load %arg2[%c1_38, %c0_39, %c0_40] : memref<2x16x1xf32, #tpu.memory_space<vmem>>, vector<1x16x1xf32>
    %46 = vector.shape_cast %45 : vector<1x16x1xf32> to vector<16x1xf32>
    %47 = vector.broadcast %46 : vector<16x1xf32> to vector<16x128xf32>
    %48 = arith.mulf %44, %47 : vector<16x128xf32>
    %c26_41 = arith.constant 26 : index
    %c0_42 = arith.constant 0 : index
    %49 = vector.load %arg8[%c26_41, %c0_42] : memref<48x128xf32, #tpu.memory_space<vmem>>, vector<16x128xf32>
    tpu.vector_store %arg8[%c26_41, %c0_42], %48 {strides = array<i32>} : memref<48x128xf32, #tpu.memory_space<vmem>>, vector<16x128xf32>,
    %c0_43 = arith.constant 0 : index
    %c0_44 = arith.constant 0 : index
    %50 = vector.load %arg8[%c0_43, %c0_44] : memref<48x128xf32, #tpu.memory_space<vmem>>, vector<40x128xf32>
    %51 = arith.truncf %50 : vector<40x128xf32> to vector<40x128xbf16>
    %c1_45 = arith.constant 1 : index
    %c0_46 = arith.constant 0 : index
    %52 = vector.load %arg8[%c1_45, %c0_46] : memref<48x128xf32, #tpu.memory_space<vmem>>, vector<40x128xf32>
    %53 = arith.truncf %52 : vector<40x128xf32> to vector<40x128xbf16>
    %c2_47 = arith.constant 2 : index
    %c0_48 = arith.constant 0 : index
    %54 = vector.load %arg8[%c2_47, %c0_48] : memref<48x128xf32, #tpu.memory_space<vmem>>, vector<40x128xf32>
    %55 = arith.truncf %54 : vector<40x128xf32> to vector<40x128xbf16>
    %c3_49 = arith.constant 3 : index
    %c0_50 = arith.constant 0 : index
    %56 = vector.load %arg8[%c3_49, %c0_50] : memref<48x128xf32, #tpu.memory_space<vmem>>, vector<40x128xf32>
    %57 = arith.truncf %56 : vector<40x128xf32> to vector<40x128xbf16>
    %c4_51 = arith.constant 4 : index
    %c0_52 = arith.constant 0 : index
    %58 = vector.load %arg8[%c4_51, %c0_52] : memref<48x128xf32, #tpu.memory_space<vmem>>, vector<40x128xf32>
    %59 = arith.truncf %58 : vector<40x128xf32> to vector<40x128xbf16>
    %60 = tpu.concatenate %51, %53, %55, %57, %59 in 1 : vector<40x128xbf16>, vector<40x128xbf16>, vector<40x128xbf16>, vector<40x128xbf16>, vector<40x128xbf16> -> vector<40x640xbf16>
    %c0_53 = arith.constant 0 : index
    %c0_54 = arith.constant 0 : index
    %61 = vector.load %arg5[%c0_53, %c0_54] : memref<640x128xbf16, #tpu.memory_space<vmem>>, vector<640x128xbf16>
    %cst_55 = arith.constant dense<0.000000e+00> : vector<40x128xf32>
    %62 = tpu.matmul %60, %61, %cst_55 {dimension_numbers = #tpu.dot_dimension_numbers<[1], [0], [0], [1], [0, 0, 1, 1], [], []>} : vector<40x640xbf16>, vector<640x128xbf16>, vector<40x128xf32> -> vector<40x128xf32>
    %c0_56 = arith.constant 0 : index
    %c0_57 = arith.constant 0 : index
    %63 = vector.load %arg6[%c0_56, %c0_57] : memref<1x128xf32, #tpu.memory_space<vmem>>, vector<1x128xf32>
    %64 = vector.broadcast %63 : vector<1x128xf32> to vector<40x128xf32>
    %65 = arith.addf %62, %64 : vector<40x128xf32>
    %66 = vector.extract_strided_slice %65 {offsets = [0, 0], sizes = [16, 128], strides = [1, 1]} : vector<40x128xf32> to vector<16x128xf32>
    %c0_58 = arith.constant 0 : index
    %c0_59 = arith.constant 0 : index
    %c0_60 = arith.constant 0 : index
    %67 = vector.load %arg2[%c0_58, %c0_59, %c0_60] : memref<2x16x1xf32, #tpu.memory_space<vmem>>, vector<1x16x1xf32>
    %68 = vector.shape_cast %67 : vector<1x16x1xf32> to vector<16x1xf32>
    %69 = vector.broadcast %68 : vector<16x1xf32> to vector<16x128xf32>
    %70 = arith.mulf %66, %69 : vector<16x128xf32>
    %c0_61 = arith.constant 0 : index
    %c0_62 = arith.constant 0 : index
    %c0_63 = arith.constant 0 : index
    %71 = vector.load %arg7[%c0_61, %c0_62, %c0_63] : memref<2x16x128xf32, #tpu.memory_space<vmem>>, vector<1x16x128xf32>
    %72 = vector.shape_cast %71 : vector<1x16x128xf32> to vector<16x128xf32>
    %73 = vector.shape_cast %70 : vector<16x128xf32> to vector<1x16x128xf32>
    tpu.vector_store %arg7[%c0_61, %c0_62, %c0_63], %73 {strides = array<i32>} : memref<2x16x128xf32, #tpu.memory_space<vmem>>, vector<1x16x128xf32>,
    %74 = vector.extract_strided_slice %65 {offsets = [24, 0], sizes = [16, 128], strides = [1, 1]} : vector<40x128xf32> to vector<16x128xf32>
    %c1_64 = arith.constant 1 : index
    %c0_65 = arith.constant 0 : index
    %c0_66 = arith.constant 0 : index
    %75 = vector.load %arg2[%c1_64, %c0_65, %c0_66] : memref<2x16x1xf32, #tpu.memory_space<vmem>>, vector<1x16x1xf32>
    %76 = vector.shape_cast %75 : vector<1x16x1xf32> to vector<16x1xf32>
    %77 = vector.broadcast %76 : vector<16x1xf32> to vector<16x128xf32>
    %78 = arith.mulf %74, %77 : vector<16x128xf32>
    %c1_67 = arith.constant 1 : index
    %c0_68 = arith.constant 0 : index
    %c0_69 = arith.constant 0 : index
    %79 = vector.load %arg7[%c1_67, %c0_68, %c0_69] : memref<2x16x128xf32, #tpu.memory_space<vmem>>, vector<1x16x128xf32>
    %80 = vector.shape_cast %79 : vector<1x16x128xf32> to vector<16x128xf32>
    %81 = vector.shape_cast %78 : vector<16x128xf32> to vector<1x16x128xf32>
    tpu.vector_store %arg7[%c1_67, %c0_68, %c0_69], %81 {strides = array<i32>} : memref<2x16x128xf32, #tpu.memory_space<vmem>>, vector<1x16x128xf32>,
    return
  }
  func.func @transform_0(%arg0: i32) -> (i32, i32, i32) {
    %c0_i32 = arith.constant 0 : i32
    %c0_i32_0 = arith.constant 0 : i32
    %c0_i32_1 = arith.constant 0 : i32
    return %arg0, %c0_i32, %c0_i32_0 : i32, i32, i32
  }
  func.func @transform_1(%arg0: i32) -> (i32, i32, i32) {
    %c0_i32 = arith.constant 0 : i32
    %c0_i32_0 = arith.constant 0 : i32
    %c0_i32_1 = arith.constant 0 : i32
    return %arg0, %c0_i32, %c0_i32_0 : i32, i32, i32
  }
  func.func @transform_2(%arg0: i32) -> (i32, i32) {
    %c0_i32 = arith.constant 0 : i32
    %c0_i32_0 = arith.constant 0 : i32
    %c0_i32_1 = arith.constant 0 : i32
    return %c0_i32, %c0_i32_0 : i32, i32
  }
  func.func @transform_3(%arg0: i32) -> (i32, i32) {
    %c0_i32 = arith.constant 0 : i32
    %c0_i32_0 = arith.constant 0 : i32
    %c0_i32_1 = arith.constant 0 : i32
    return %c0_i32, %c0_i32_0 : i32, i32
  }
  func.func @transform_4(%arg0: i32) -> (i32, i32) {
    %c0_i32 = arith.constant 0 : i32
    %c0_i32_0 = arith.constant 0 : i32
    %c0_i32_1 = arith.constant 0 : i32
    return %c0_i32, %c0_i32_0 : i32, i32
  }
  func.func @transform_5(%arg0: i32) -> (i32, i32) {
    %c0_i32 = arith.constant 0 : i32
    %c0_i32_0 = arith.constant 0 : i32
    %c0_i32_1 = arith.constant 0 : i32
    return %c0_i32, %c0_i32_0 : i32, i32
  }
  func.func @transform_6(%arg0: i32) -> (i32, i32, i32) {
    %c0_i32 = arith.constant 0 : i32
    %c0_i32_0 = arith.constant 0 : i32
    %c0_i32_1 = arith.constant 0 : i32
    return %arg0, %c0_i32, %c0_i32_0 : i32, i32, i32
  }
}

</mosaic_0001>

<llo_original>
// kernel: tpu_custom_call.1
$region0: #{tpu_custom_call.1}
  #allocation0 [shape = 'u32[]', space=smem, size = 0x4, offset = 0x4, fixed_abs, tag = 'smem constant byte address 0x4 - core index']
  #allocation1 [shape = 'u32[144,128]{1,0:T(1,128)}', space=vmem, size = 0x12000, scoped, tag = 'internal scratch']
  #allocation2 [shape = 'f32[48,128]{1,0:T(8,128)}', space=vmem, size = 0x6000, scoped, tag = 'scratch operand']
  %s0 = inlined_call_operand.vmem [shape: f32[2,16,128], index: 0, kind: input, shape index: {}]
  %s1 = inlined_call_operand.vmem [shape: f32[2,16,1], index: 1, kind: input, shape index: {}]
  %s2 = inlined_call_operand.hbm [shape: bf16[640,128], index: 2, kind: input, shape index: {}]
  %s3 = inlined_call_operand.vmem [shape: f32[1,128], index: 3, kind: input, shape index: {}]
  %s4 = inlined_call_operand.hbm [shape: bf16[640,128], index: 4, kind: input, shape index: {}]
  %s5 = inlined_call_operand.vmem [shape: f32[1,128], index: 5, kind: input, shape index: {}]
  %s6 = inlined_call_operand.hbm [shape: f32[2,16,128], index: 6, kind: output, shape index: {}]
  %s7 = sld [smem:[#allocation0]]
  $region42: #{tpu_custom_call.1} parent=0
    _
  %s9 = ssub.s32 1, %s7
  %s10 = scalar_select 0, %s9, %s7
  $region1: #{tpu_custom_call.1} parent=0
    #allocation3 [shape = 'u8[163840]{0}', space=vmem, size = 0x28000, scoped, tag = 'input window, operand 2, single buffered']
    #allocation4 [shape = 's32[1]{0}', space=sflag, size = 0x4, scoped, tag = 'scoped memory for tpu_custom_call.1']
    #allocation5 [shape = 's32[1]{0}', space=sflag, size = 0x4, scoped, tag = 'scoped memory for tpu_custom_call.1']
    #allocation6 [shape = 'u8[163840]{0}', space=vmem, size = 0x28000, scoped, tag = 'input window, operand 4, single buffered']
    #allocation7 [shape = 's32[1]{0}', space=sflag, size = 0x4, scoped, tag = 'scoped memory for tpu_custom_call.1']
    #allocation8 [shape = 'u8[16384]{0}', space=vmem, size = 0x4000, scoped, tag = 'output window, operand 0, single buffered']
    %11 = vsyncpa [#allocation4], 0
    %12 = vsyncpa [#allocation7], 0
    %13 = vsyncpa [#allocation5], 0
    // Predicated region
    $region2: #{tpu_custom_call.1} parent=1 // pred_check
      _
    $region3: #{tpu_custom_call.1} parent=1 // pred_check_branch
      %15 = sbr.rel (0) target = $region5
    $region4: #{tpu_custom_call.1} parent=1 // pred_region
      _
    $region5: #{tpu_custom_call.1} parent=1 // pred_fallthru
      _
    // Predicated region
    $region6: #{tpu_custom_call.1} parent=1 // pred_check
      _
    $region7: #{tpu_custom_call.1} parent=1 // pred_check_branch
      %17 = sbr.rel (0) target = $region9
    $region8: #{tpu_custom_call.1} parent=1 // pred_region
      _
    $region9: #{tpu_custom_call.1} parent=1 // pred_fallthru
      _
    // Predicated region
    $region10: #{tpu_custom_call.1} parent=1 // pred_check
      _
    $region11: #{tpu_custom_call.1} parent=1 // pred_check_branch
      %19 = sbr.rel (0) target = $region13
    $region12: #{tpu_custom_call.1} parent=1 // pred_region
      %s21 = ssub.s32 5120, 5120
      %22 = vsyncadd [#allocation4], %s21
      %s23 = sshll.u32 [#allocation3], 4
      %s24 = int_to_ptr.vmem [resolvable:$true] %s23
      %29 = dma.hbm_to_vmem [thread:$0]  %s2, 5120, %s24, [#allocation4], 64, 64, 4
    $region13: #{tpu_custom_call.1} parent=1 // pred_fallthru
      _
    // Predicated region
    $region14: #{tpu_custom_call.1} parent=1 // pred_check
      _
    $region15: #{tpu_custom_call.1} parent=1 // pred_check_branch
      %31 = sbr.rel (0) target = $region17
    $region16: #{tpu_custom_call.1} parent=1 // pred_region
      _
    $region17: #{tpu_custom_call.1} parent=1 // pred_fallthru
      _
    // Predicated region
    $region18: #{tpu_custom_call.1} parent=1 // pred_check
      _
    $region19: #{tpu_custom_call.1} parent=1 // pred_check_branch
      %33 = sbr.rel (0) target = $region21
    $region20: #{tpu_custom_call.1} parent=1 // pred_region
      %s35 = ssub.s32 5120, 5120
      %36 = vsyncadd [#allocation7], %s35
      %s37 = sshll.u32 [#allocation6], 4
      %s38 = int_to_ptr.vmem [resolvable:$true] %s37
      %43 = dma.hbm_to_vmem [thread:$0]  %s4, 5120, %s38, [#allocation7], 64, 64, 4
    $region21: #{tpu_custom_call.1} parent=1 // pred_fallthru
      _
    // Predicated region
    $region22: #{tpu_custom_call.1} parent=1 // pred_check
      _
    $region23: #{tpu_custom_call.1} parent=1 // pred_check_branch
      %45 = sbr.rel (0) target = $region25
    $region24: #{tpu_custom_call.1} parent=1 // pred_region
      _
    $region25: #{tpu_custom_call.1} parent=1 // pred_fallthru
      _
    // Predicated region
    $region26: #{tpu_custom_call.1} parent=1 // pred_check
      _
    $region27: #{tpu_custom_call.1} parent=1 // pred_check_branch
      %47 = sbr.rel (0) target = $region29
    $region28: #{tpu_custom_call.1} parent=1 // pred_region
      %48 = dma.done [#allocation4], 5120
    $region29: #{tpu_custom_call.1} parent=1 // pred_fallthru
      _
    // Predicated region
    $region30: #{tpu_custom_call.1} parent=1 // pred_check
      _
    $region31: #{tpu_custom_call.1} parent=1 // pred_check_branch
      %50 = sbr.rel (0) target = $region33
    $region32: #{tpu_custom_call.1} parent=1 // pred_region
      %51 = dma.done [#allocation7], 5120
    $region33: #{tpu_custom_call.1} parent=1 // pred_fallthru
      _
    %53 = vst [vmem:[#allocation2] sm:$0x3] 0.0
    %54 = vst [vmem:[#allocation2 + $0x12] sm:$0x3f] 0.0
    %v55 = vld [vmem:[%s0] sm:$0xff]
    %v56 = vld [vmem:[%s0 + $0x8] sm:$0xff]
    %v57 = vld [vmem:[%s1] sm:$0xff]
    %v58 = vld [vmem:[%s1 + $0x8] sm:$0xff]
    %60 = vset.pattern.permute.xlu0 0
    %61 = vperm.xlu0 %60, %v57
    %v62 = vpop.permute.xlu0 %61
    %65 = vset.pattern.permute.xlu0 0
    %66 = vperm.xlu0 %65, %v58
    %v67 = vpop.permute.xlu0 %66
    %v69 = vmul.f32 %v55, %v62
    %v70 = vmul.f32 %v56, %v67
    %71 = vst [vmem:[#allocation2 + $0x2] sm:$0xff] %v69
    %72 = vst [vmem:[#allocation2 + $0xa] sm:$0xff] %v70
    %73 = vst [vmem:[#allocation2 + $0x18] sm:$0x3] 0.0
    %74 = vst [vmem:[#allocation2 + $0x2a] sm:$0x3f] 0.0
    %s75 = scalar_lea.vmem %s0, 16
    %v76 = vld [vmem:[%s75] sm:$0xff]
    %v77 = vld [vmem:[%s75 + $0x8] sm:$0xff]
    %s78 = scalar_lea.vmem %s1, 16
    %v79 = vld [vmem:[%s78] sm:$0xff]
    %v80 = vld [vmem:[%s78 + $0x8] sm:$0xff]
    %82 = vset.pattern.permute.xlu0 0
    %83 = vperm.xlu0 %82, %v79
    %v84 = vpop.permute.xlu0 %83
    %87 = vset.pattern.permute.xlu0 0
    %88 = vperm.xlu0 %87, %v80
    %v89 = vpop.permute.xlu0 %88
    %v91 = vmul.f32 %v76, %v84
    %v92 = vmul.f32 %v77, %v89
    %93 = vst [vmem:[#allocation2 + $0x1a] sm:$0xff] %v91
    %94 = vst [vmem:[#allocation2 + $0x22] sm:$0xff] %v92
    %v95 = vld [vmem:[#allocation2] sm:$0xff]
    %v96 = vld [vmem:[#allocation2 + $0x8] sm:$0xff]
    %v97 = vld [vmem:[#allocation2 + $0x10] sm:$0xff]
    %v98 = vld [vmem:[#allocation2 + $0x18] sm:$0xff]
    %v99 = vld [vmem:[#allocation2 + $0x20] sm:$0xff]
    %v100 = vpack.c.bf16 %v96, %v95
    %v101 = vpack.c.bf16 %v98, %v97
    %v102 = vpack.c.bf16 %v99, %v99
    %v103 = vld [vmem:[#allocation2 + $0x1] sm:$0xff]
    %v104 = vld [vmem:[#allocation2 + $0x9] sm:$0xff]
    %v105 = vld [vmem:[#allocation2 + $0x11] sm:$0xff]
    %v106 = vld [vmem:[#allocation2 + $0x19] sm:$0xff]
    %v107 = vld [vmem:[#allocation2 + $0x21] sm:$0xff]
    %v108 = vpack.c.bf16 %v104, %v103
    %v109 = vpack.c.bf16 %v106, %v105
    %v110 = vpack.c.bf16 %v107, %v107
    %v111 = vld [vmem:[#allocation2 + $0x2] sm:$0xff]
    %v112 = vld [vmem:[#allocation2 + $0xa] sm:$0xff]
    %v113 = vld [vmem:[#allocation2 + $0x12] sm:$0xff]
    %v114 = vld [vmem:[#allocation2 + $0x1a] sm:$0xff]
    %v115 = vld [vmem:[#allocation2 + $0x22] sm:$0xff]
    %v116 = vpack.c.bf16 %v112, %v111
    %v117 = vpack.c.bf16 %v114, %v113
    %v118 = vpack.c.bf16 %v115, %v115
    %v119 = vld [vmem:[#allocation2 + $0x3] sm:$0xff]
    %v120 = vld [vmem:[#allocation2 + $0xb] sm:$0xff]
    %v121 = vld [vmem:[#allocation2 + $0x13] sm:$0xff]
    %v122 = vld [vmem:[#allocation2 + $0x1b] sm:$0xff]
    %v123 = vld [vmem:[#allocation2 + $0x23] sm:$0xff]
    %v124 = vpack.c.bf16 %v120, %v119
    %v125 = vpack.c.bf16 %v122, %v121
    %v126 = vpack.c.bf16 %v123, %v123
    %v127 = vld [vmem:[#allocation2 + $0x4] sm:$0xff]
    %v128 = vld [vmem:[#allocation2 + $0xc] sm:$0xff]
    %v129 = vld [vmem:[#allocation2 + $0x14] sm:$0xff]
    %v130 = vld [vmem:[#allocation2 + $0x1c] sm:$0xff]
    %v131 = vld [vmem:[#allocation2 + $0x24] sm:$0xff]
    %v132 = vpack.c.bf16 %v128, %v127
    %v133 = vpack.c.bf16 %v130, %v129
    %v134 = vpack.c.bf16 %v131, %v131
    %v135 = vld [vmem:[#allocation3] sm:$0xf]
    %v136 = vld [vmem:[#allocation3 + $0x4] sm:$0xf]
    %v137 = vld [vmem:[#allocation3 + $0x8] sm:$0xf]
    %v138 = vld [vmem:[#allocation3 + $0xc] sm:$0xf]
    %v139 = vld [vmem:[#allocation3 + $0x10] sm:$0xf]
    %v140 = vld [vmem:[#allocation3 + $0x14] sm:$0xf]
    %v141 = vld [vmem:[#allocation3 + $0x18] sm:$0xf]
    %v142 = vld [vmem:[#allocation3 + $0x1c] sm:$0xf]
    %v143 = vld [vmem:[#allocation3 + $0x20] sm:$0xf]
    %v144 = vld [vmem:[#allocation3 + $0x24] sm:$0xf]
    %v145 = vld [vmem:[#allocation3 + $0x28] sm:$0xf]
    %v146 = vld [vmem:[#allocation3 + $0x2c] sm:$0xf]
    %v147 = vld [vmem:[#allocation3 + $0x30] sm:$0xf]
    %v148 = vld [vmem:[#allocation3 + $0x34] sm:$0xf]
    %v149 = vld [vmem:[#allocation3 + $0x38] sm:$0xf]
    %v150 = vld [vmem:[#allocation3 + $0x3c] sm:$0xf]
    %v151 = vld [vmem:[#allocation3 + $0x40] sm:$0xf]
    %v152 = vld [vmem:[#allocation3 + $0x44] sm:$0xf]
    %v153 = vld [vmem:[#allocation3 + $0x48] sm:$0xf]
    %v154 = vld [vmem:[#allocation3 + $0x4c] sm:$0xf]
    %v155 = vld [vmem:[#allocation3 + $0x50] sm:$0xf]
    %v156 = vld [vmem:[#allocation3 + $0x54] sm:$0xf]
    %v157 = vld [vmem:[#allocation3 + $0x58] sm:$0xf]
    %v158 = vld [vmem:[#allocation3 + $0x5c] sm:$0xf]
    %v159 = vld [vmem:[#allocation3 + $0x60] sm:$0xf]
    %v160 = vld [vmem:[#allocation3 + $0x64] sm:$0xf]
    %v161 = vld [vmem:[#allocation3 + $0x68] sm:$0xf]
    %v162 = vld [vmem:[#allocation3 + $0x6c] sm:$0xf]
    %v163 = vld [vmem:[#allocation3 + $0x70] sm:$0xf]
    %v164 = vld [vmem:[#allocation3 + $0x74] sm:$0xf]
    %v165 = vld [vmem:[#allocation3 + $0x78] sm:$0xf]
    %v166 = vld [vmem:[#allocation3 + $0x7c] sm:$0xf]
    %v167 = vld [vmem:[#allocation3 + $0x80] sm:$0xf]
    %v168 = vld [vmem:[#allocation3 + $0x84] sm:$0xf]
    %v169 = vld [vmem:[#allocation3 + $0x88] sm:$0xf]
    %v170 = vld [vmem:[#allocation3 + $0x8c] sm:$0xf]
    %v171 = vld [vmem:[#allocation3 + $0x90] sm:$0xf]
    %v172 = vld [vmem:[#allocation3 + $0x94] sm:$0xf]
    %v173 = vld [vmem:[#allocation3 + $0x98] sm:$0xf]
    %v174 = vld [vmem:[#allocation3 + $0x9c] sm:$0xf]
    %v175 = vld [vmem:[#allocation3 + $0xa0] sm:$0xf]
    %v176 = vld [vmem:[#allocation3 + $0xa4] sm:$0xf]
    %v177 = vld [vmem:[#allocation3 + $0xa8] sm:$0xf]
    %v178 = vld [vmem:[#allocation3 + $0xac] sm:$0xf]
    %v179 = vld [vmem:[#allocation3 + $0xb0] sm:$0xf]
    %v180 = vld [vmem:[#allocation3 + $0xb4] sm:$0xf]
    %v181 = vld [vmem:[#allocation3 + $0xb8] sm:$0xf]
    %v182 = vld [vmem:[#allocation3 + $0xbc] sm:$0xf]
    %v183 = vld [vmem:[#allocation3 + $0xc0] sm:$0xf]
    %v184 = vld [vmem:[#allocation3 + $0xc4] sm:$0xf]
    %v185 = vld [vmem:[#allocation3 + $0xc8] sm:$0xf]
    %v186 = vld [vmem:[#allocation3 + $0xcc] sm:$0xf]
    %v187 = vld [vmem:[#allocation3 + $0xd0] sm:$0xf]
    %v188 = vld [vmem:[#allocation3 + $0xd4] sm:$0xf]
    %v189 = vld [vmem:[#allocation3 + $0xd8] sm:$0xf]
    %v190 = vld [vmem:[#allocation3 + $0xdc] sm:$0xf]
    %v191 = vld [vmem:[#allocation3 + $0xe0] sm:$0xf]
    %v192 = vld [vmem:[#allocation3 + $0xe4] sm:$0xf]
    %v193 = vld [vmem:[#allocation3 + $0xe8] sm:$0xf]
    %v194 = vld [vmem:[#allocation3 + $0xec] sm:$0xf]
    %v195 = vld [vmem:[#allocation3 + $0xf0] sm:$0xf]
    %v196 = vld [vmem:[#allocation3 + $0xf4] sm:$0xf]
    %v197 = vld [vmem:[#allocation3 + $0xf8] sm:$0xf]
    %v198 = vld [vmem:[#allocation3 + $0xfc] sm:$0xf]
    %v199 = vld [vmem:[#allocation3 + $0x100] sm:$0xf]
    %v200 = vld [vmem:[#allocation3 + $0x104] sm:$0xf]
    %v201 = vld [vmem:[#allocation3 + $0x108] sm:$0xf]
    %v202 = vld [vmem:[#allocation3 + $0x10c] sm:$0xf]
    %v203 = vld [vmem:[#allocation3 + $0x110] sm:$0xf]
    %v204 = vld [vmem:[#allocation3 + $0x114] sm:$0xf]
    %v205 = vld [vmem:[#allocation3 + $0x118] sm:$0xf]
    %v206 = vld [vmem:[#allocation3 + $0x11c] sm:$0xf]
    %v207 = vld [vmem:[#allocation3 + $0x120] sm:$0xf]
    %v208 = vld [vmem:[#allocation3 + $0x124] sm:$0xf]
    %v209 = vld [vmem:[#allocation3 + $0x128] sm:$0xf]
    %v210 = vld [vmem:[#allocation3 + $0x12c] sm:$0xf]
    %v211 = vld [vmem:[#allocation3 + $0x130] sm:$0xf]
    %v212 = vld [vmem:[#allocation3 + $0x134] sm:$0xf]
    %v213 = vld [vmem:[#allocation3 + $0x138] sm:$0xf]
    %v214 = vld [vmem:[#allocation3 + $0x13c] sm:$0xf]
    %v215 = vld [vmem:[%s3] sm:$0x1]
    %v217 = vlaneseq
    %v218 = vshrl.u32 %v217, 7
    %v219 = vsub.s32 0, %v218
    %v220 = vrot.slane %v215, %v219
    %v302 = vunpack.c.l.b16 %v135
    %v303 = vunpack.c.l.b16 %v136
    %v304 = vunpack.c.l.b16 %v137
    %v305 = vunpack.c.l.b16 %v138
    %v306 = vunpack.c.l.b16 %v139
    %v307 = vunpack.c.l.b16 %v140
    %v308 = vunpack.c.l.b16 %v141
    %v309 = vunpack.c.l.b16 %v142
    %v310 = vunpack.c.l.b16 %v143
    %v311 = vunpack.c.l.b16 %v144
    %v312 = vunpack.c.l.b16 %v145
    %v313 = vunpack.c.l.b16 %v146
    %v314 = vunpack.c.l.b16 %v147
    %v315 = vunpack.c.l.b16 %v148
    %v316 = vunpack.c.l.b16 %v149
    %v317 = vunpack.c.l.b16 %v150
    %v318 = vunpack.c.l.b16 %v151
    %v319 = vunpack.c.l.b16 %v152
    %v320 = vunpack.c.l.b16 %v153
    %v321 = vunpack.c.l.b16 %v154
    %v322 = vunpack.c.l.b16 %v155
    %v323 = vunpack.c.l.b16 %v156
    %v324 = vunpack.c.l.b16 %v157
    %v325 = vunpack.c.l.b16 %v158
    %v326 = vunpack.c.l.b16 %v159
    %v327 = vunpack.c.l.b16 %v160
    %v328 = vunpack.c.l.b16 %v161
    %v329 = vunpack.c.l.b16 %v162
    %v330 = vunpack.c.l.b16 %v163
    %v331 = vunpack.c.l.b16 %v164
    %v332 = vunpack.c.l.b16 %v165
    %v333 = vunpack.c.l.b16 %v166
    %v334 = vunpack.c.l.b16 %v167
    %v335 = vunpack.c.l.b16 %v168
    %v336 = vunpack.c.l.b16 %v169
    %v337 = vunpack.c.l.b16 %v170
    %v338 = vunpack.c.l.b16 %v171
    %v339 = vunpack.c.l.b16 %v172
    %v340 = vunpack.c.l.b16 %v173
    %v341 = vunpack.c.l.b16 %v174
    %v342 = vunpack.c.l.b16 %v175
    %v343 = vunpack.c.l.b16 %v176
    %v344 = vunpack.c.l.b16 %v177
    %v345 = vunpack.c.l.b16 %v178
    %v346 = vunpack.c.l.b16 %v179
    %v347 = vunpack.c.l.b16 %v180
    %v348 = vunpack.c.l.b16 %v181
    %v349 = vunpack.c.l.b16 %v182
    %v350 = vunpack.c.l.b16 %v183
    %v351 = vunpack.c.l.b16 %v184
    %v352 = vunpack.c.l.b16 %v185
    %v353 = vunpack.c.l.b16 %v186
    %v354 = vunpack.c.l.b16 %v187
    %v355 = vunpack.c.l.b16 %v188
    %v356 = vunpack.c.l.b16 %v189
    %v357 = vunpack.c.l.b16 %v190
    %v358 = vunpack.c.l.b16 %v191
    %v359 = vunpack.c.l.b16 %v192
    %v360 = vunpack.c.l.b16 %v193
    %v361 = vunpack.c.l.b16 %v194
    %v362 = vunpack.c.l.b16 %v195
    %v363 = vunpack.c.l.b16 %v196
    %v364 = vunpack.c.l.b16 %v197
    %v365 = vunpack.c.l.b16 %v198
    %v366 = vunpack.c.l.b16 %v199
    %v367 = vunpack.c.l.b16 %v200
    %v368 = vunpack.c.l.b16 %v201
    %v369 = vunpack.c.l.b16 %v202
    %v370 = vunpack.c.l.b16 %v203
    %v371 = vunpack.c.l.b16 %v204
    %v372 = vunpack.c.l.b16 %v205
    %v373 = vunpack.c.l.b16 %v206
    %v374 = vunpack.c.l.b16 %v207
    %v375 = vunpack.c.l.b16 %v208
    %v376 = vunpack.c.l.b16 %v209
    %v377 = vunpack.c.l.b16 %v210
    %v378 = vunpack.c.l.b16 %v211
    %v379 = vunpack.c.l.b16 %v212
    %v380 = vunpack.c.l.b16 %v213
    %v381 = vunpack.c.l.b16 %v214
    %v382 = vpack.c.b16 %v303, %v302
    %v383 = vpack.c.b16 %v305, %v304
    %v384 = vpack.c.b16 %v307, %v306
    %v385 = vpack.c.b16 %v309, %v308
    %v386 = vpack.c.b16 %v311, %v310
    %v387 = vpack.c.b16 %v313, %v312
    %v388 = vpack.c.b16 %v315, %v314
    %v389 = vpack.c.b16 %v317, %v316
    %v390 = vpack.c.b16 %v319, %v318
    %v391 = vpack.c.b16 %v321, %v320
    %v392 = vpack.c.b16 %v323, %v322
    %v393 = vpack.c.b16 %v325, %v324
    %v394 = vpack.c.b16 %v327, %v326
    %v395 = vpack.c.b16 %v329, %v328
    %v396 = vpack.c.b16 %v331, %v330
    %v397 = vpack.c.b16 %v333, %v332
    %v398 = vpack.c.b16 %v335, %v334
    %v399 = vpack.c.b16 %v337, %v336
    %v400 = vpack.c.b16 %v339, %v338
    %v401 = vpack.c.b16 %v341, %v340
    %v402 = vpack.c.b16 %v343, %v342
    %v403 = vpack.c.b16 %v345, %v344
    %v404 = vpack.c.b16 %v347, %v346
    %v405 = vpack.c.b16 %v349, %v348
    %v406 = vpack.c.b16 %v351, %v350
    %v407 = vpack.c.b16 %v353, %v352
    %v408 = vpack.c.b16 %v355, %v354
    %v409 = vpack.c.b16 %v357, %v356
    %v410 = vpack.c.b16 %v359, %v358
    %v411 = vpack.c.b16 %v361, %v360
    %v412 = vpack.c.b16 %v363, %v362
    %v413 = vpack.c.b16 %v365, %v364
    %v414 = vpack.c.b16 %v367, %v366
    %v415 = vpack.c.b16 %v369, %v368
    %v416 = vpack.c.b16 %v371, %v370
    %v417 = vpack.c.b16 %v373, %v372
    %v418 = vpack.c.b16 %v375, %v374
    %v419 = vpack.c.b16 %v377, %v376
    %v420 = vpack.c.b16 %v379, %v378
    %v421 = vpack.c.b16 %v381, %v380
    %462 = vmatprep.subr.bf16.mxu0 0
    %463 = vmatpush1.bf16.msra.mxu0 %v382
    %464 = vmatprep.subr.bf16.mxu0 0
    %465 = vmatpush1.bf16.msra.mxu0 %v383
    %466 = vmatprep.subr.bf16.mxu0 0
    %467 = vmatpush1.bf16.msra.mxu0 %v384
    %468 = vmatprep.subr.bf16.mxu0 0
    %469 = vmatpush1.bf16.msra.mxu0 %v385
    %470 = vmatprep.subr.bf16.mxu0 0
    %471 = vmatpush1.bf16.msra.mxu0 %v386
    %472 = vmatprep.subr.bf16.mxu0 0
    %473 = vmatpush1.bf16.msra.mxu0 %v387
    %474 = vmatprep.subr.bf16.mxu0 0
    %475 = vmatpush1.bf16.msra.mxu0 %v388
    %476 = vmatprep.subr.bf16.mxu0 0
    %477 = vmatpush1.bf16.msra.mxu0 %v389
    %478 = vmatprep.subr.bf16.mxu0 0
    %479 = vmatpush1.bf16.msra.mxu0 %v390
    %480 = vmatprep.subr.bf16.mxu0 0
    %481 = vmatpush1.bf16.msra.mxu0 %v391
    %482 = vmatprep.subr.bf16.mxu0 0
    %483 = vmatpush1.bf16.msra.mxu0 %v392
    %484 = vmatprep.subr.bf16.mxu0 0
    %485 = vmatpush1.bf16.msra.mxu0 %v393
    %486 = vmatprep.subr.bf16.mxu0 0
    %487 = vmatpush1.bf16.msra.mxu0 %v394
    %488 = vmatprep.subr.bf16.mxu0 0
    %489 = vmatpush1.bf16.msra.mxu0 %v395
    %490 = vmatprep.subr.bf16.mxu0 0
    %491 = vmatpush1.bf16.msra.mxu0 %v396
    %492 = vmatprep.subr.bf16.mxu0 0
    %493 = vmatpush1.bf16.msra.mxu0 %v397
    %494 = vmatprep.mubr.bf16.mxu0 %v108
    %495 = vmatmul.mubr.bf16.gmra.mrb[0].mxu0 %v100
    %v496 = vpop.f32.mrb[0].mxu0
    %v497 = vadd.f32 %v220, %v496
    %v498 = vpop.f32.mrb[0].mxu0
    %v499 = vpop.f32.mrb[0].mxu0
    %v500 = vadd.f32 %v220, %v499
    %v501 = vpop.f32.mrb[0].mxu0
    %502 = vmatprep.mubr.bf16.mxu0 %v109
    %503 = vmatmul.mubr.bf16.gmra.mrb[0].mxu0 %v101
    %v504 = vpop.f32.mrb[0].mxu0
    %v505 = vpop.f32.mrb[0].mxu0
    %v506 = vpop.f32.mrb[0].mxu0
    %v507 = vadd.f32 %v220, %v506
    %v508 = vpop.f32.mrb[0].mxu0
    %509 = vmatprep.mubr.bf16.mxu0 %v110
    %510 = vmatmul.mubr.bf16.gmra.mrb[0].mxu0 %v102
    %v511 = vpop.f32.mrb[0].mxu0
    %v512 = vadd.f32 %v220, %v511
    %v513 = vpop.f32.mrb[0].mxu0
    %v514 = vpop.f32.mrb[0].mxu0
    %v515 = vpop.f32.mrb[0].mxu0
    %516 = vdwg.mxu0
    %517 = vmatprep.subr.bf16.mxu0 0
    %518 = vmatpush1.bf16.msra.mxu0 %v398
    %519 = vmatprep.subr.bf16.mxu0 0
    %520 = vmatpush1.bf16.msra.mxu0 %v399
    %521 = vmatprep.subr.bf16.mxu0 0
    %522 = vmatpush1.bf16.msra.mxu0 %v400
    %523 = vmatprep.subr.bf16.mxu0 0
    %524 = vmatpush1.bf16.msra.mxu0 %v401
    %525 = vmatprep.subr.bf16.mxu0 0
    %526 = vmatpush1.bf16.msra.mxu0 %v402
    %527 = vmatprep.subr.bf16.mxu0 0
    %528 = vmatpush1.bf16.msra.mxu0 %v403
    %529 = vmatprep.subr.bf16.mxu0 0
    %530 = vmatpush1.bf16.msra.mxu0 %v404
    %531 = vmatprep.subr.bf16.mxu0 0
    %532 = vmatpush1.bf16.msra.mxu0 %v405
    %533 = vmatprep.subr.bf16.mxu0 0
    %534 = vmatpush1.bf16.msra.mxu0 %v406
    %535 = vmatprep.subr.bf16.mxu0 0
    %536 = vmatpush1.bf16.msra.mxu0 %v407
    %537 = vmatprep.subr.bf16.mxu0 0
    %538 = vmatpush1.bf16.msra.mxu0 %v408
    %539 = vmatprep.subr.bf16.mxu0 0
    %540 = vmatpush1.bf16.msra.mxu0 %v409
    %541 = vmatprep.subr.bf16.mxu0 0
    %542 = vmatpush1.bf16.msra.mxu0 %v410
    %543 = vmatprep.subr.bf16.mxu0 0
    %544 = vmatpush1.bf16.msra.mxu0 %v411
    %545 = vmatprep.subr.bf16.mxu0 0
    %546 = vmatpush1.bf16.msra.mxu0 %v412
    %547 = vmatprep.subr.bf16.mxu0 0
    %548 = vmatpush1.bf16.msra.mxu0 %v413
    %549 = vmatprep.mubr.bf16.mxu0 %v124
    %550 = vmatmul.mubr.bf16.gmra.mrb[0].mxu0 %v116
    %v551 = vpop.f32.mrb[0].mxu0
    %v552 = vadd.f32 %v497, %v551
    %v553 = vpop.f32.mrb[0].mxu0
    %v554 = vpop.f32.mrb[0].mxu0
    %v555 = vadd.f32 %v500, %v554
    %v556 = vpop.f32.mrb[0].mxu0
    %557 = vmatprep.mubr.bf16.mxu0 %v125
    %558 = vmatmul.mubr.bf16.gmra.mrb[0].mxu0 %v117
    %v559 = vpop.f32.mrb[0].mxu0
    %v560 = vpop.f32.mrb[0].mxu0
    %v561 = vpop.f32.mrb[0].mxu0
    %v562 = vadd.f32 %v507, %v561
    %v563 = vpop.f32.mrb[0].mxu0
    %564 = vmatprep.mubr.bf16.mxu0 %v126
    %565 = vmatmul.mubr.bf16.gmra.mrb[0].mxu0 %v118
    %v566 = vpop.f32.mrb[0].mxu0
    %v567 = vadd.f32 %v512, %v566
    %v568 = vpop.f32.mrb[0].mxu0
    %v569 = vpop.f32.mrb[0].mxu0
    %v570 = vpop.f32.mrb[0].mxu0
    %571 = vdwg.mxu0
    %572 = vmatprep.subr.bf16.mxu0 0
    %573 = vmatpush1.bf16.msra.mxu0 %v414
    %574 = vmatprep.subr.bf16.mxu0 0
    %575 = vmatpush1.bf16.msra.mxu0 %v415
    %576 = vmatprep.subr.bf16.mxu0 0
    %577 = vmatpush1.bf16.msra.mxu0 %v416
    %578 = vmatprep.subr.bf16.mxu0 0
    %579 = vmatpush1.bf16.msra.mxu0 %v417
    %580 = vmatprep.subr.bf16.mxu0 0
    %581 = vmatpush1.bf16.msra.mxu0 %v418
    %582 = vmatprep.subr.bf16.mxu0 0
    %583 = vmatpush1.bf16.msra.mxu0 %v419
    %584 = vmatprep.subr.bf16.mxu0 0
    %585 = vmatpush1.bf16.msra.mxu0 %v420
    %586 = vmatprep.subr.bf16.mxu0 0
    %587 = vmatpush1.bf16.msra.mxu0 %v421
    %588 = vmatprep.subr.bf16.mxu0 0
    %589 = vmatpush1.bf16.msra.mxu0 0
    %590 = vmatprep.subr.bf16.mxu0 0
    %591 = vmatpush1.bf16.msra.mxu0 0
    %592 = vmatprep.subr.bf16.mxu0 0
    %593 = vmatpush1.bf16.msra.mxu0 0
    %594 = vmatprep.subr.bf16.mxu0 0
    %595 = vmatpush1.bf16.msra.mxu0 0
    %596 = vmatprep.subr.bf16.mxu0 0
    %597 = vmatpush1.bf16.msra.mxu0 0
    %598 = vmatprep.subr.bf16.mxu0 0
    %599 = vmatpush1.bf16.msra.mxu0 0
    %600 = vmatprep.subr.bf16.mxu0 0
    %601 = vmatpush1.bf16.msra.mxu0 0
    %602 = vmatprep.subr.bf16.mxu0 0
    %603 = vmatpush1.bf16.msra.mxu0 0
    %604 = vmatprep.mubr.bf16.mxu0 0
    %605 = vmatmul.mubr.bf16.gmra.mrb[0].mxu0 %v132
    %v606 = vpop.f32.mrb[0].mxu0
    %v607 = vadd.f32 %v552, %v606
    %v608 = vpop.f32.mrb[0].mxu0
    %v609 = vpop.f32.mrb[0].mxu0
    %v610 = vadd.f32 %v555, %v609
    %v611 = vpop.f32.mrb[0].mxu0
    %612 = vmatprep.mubr.bf16.mxu0 0
    %613 = vmatmul.mubr.bf16.gmra.mrb[0].mxu0 %v133
    %v614 = vpop.f32.mrb[0].mxu0
    %v615 = vpop.f32.mrb[0].mxu0
    %v616 = vpop.f32.mrb[0].mxu0
    %v617 = vadd.f32 %v562, %v616
    %v618 = vpop.f32.mrb[0].mxu0
    %619 = vmatprep.mubr.bf16.mxu0 0
    %620 = vmatmul.mubr.bf16.gmra.mrb[0].mxu0 %v134
    %v621 = vpop.f32.mrb[0].mxu0
    %v622 = vadd.f32 %v567, %v621
    %v623 = vpop.f32.mrb[0].mxu0
    %v624 = vpop.f32.mrb[0].mxu0
    %v625 = vpop.f32.mrb[0].mxu0
    %626 = vdwg.mxu0
    %v627 = vld [vmem:[%s1] sm:$0xff]
    %v628 = vld [vmem:[%s1 + $0x8] sm:$0xff]
    %630 = vset.pattern.permute.xlu0 0
    %631 = vperm.xlu0 %630, %v627
    %v632 = vpop.permute.xlu0 %631
    %635 = vset.pattern.permute.xlu0 0
    %636 = vperm.xlu0 %635, %v628
    %v637 = vpop.permute.xlu0 %636
    %v639 = vmul.f32 %v607, %v632
    %v640 = vmul.f32 %v610, %v637
    %641 = vst [vmem:[#allocation2 + $0x2] sm:$0xff] %v639
    %642 = vst [vmem:[#allocation2 + $0xa] sm:$0xff] %v640
    %v643 = vld [vmem:[%s78] sm:$0xff]
    %v644 = vld [vmem:[%s78 + $0x8] sm:$0xff]
    %646 = vset.pattern.permute.xlu0 0
    %647 = vperm.xlu0 %646, %v643
    %v648 = vpop.permute.xlu0 %647
    %651 = vset.pattern.permute.xlu0 0
    %652 = vperm.xlu0 %651, %v644
    %v653 = vpop.permute.xlu0 %652
    %v655 = vmul.f32 %v617, %v648
    %v656 = vmul.f32 %v622, %v653
    %657 = vst [vmem:[#allocation2 + $0x1a] sm:$0xff] %v655
    %658 = vst [vmem:[#allocation2 + $0x22] sm:$0xff] %v656
    %v659 = vld [vmem:[#allocation2] sm:$0xff]
    %v660 = vld [vmem:[#allocation2 + $0x8] sm:$0xff]
    %v661 = vld [vmem:[#allocation2 + $0x10] sm:$0xff]
    %v662 = vld [vmem:[#allocation2 + $0x18] sm:$0xff]
    %v663 = vld [vmem:[#allocation2 + $0x20] sm:$0xff]
    %v664 = vpack.c.bf16 %v660, %v659
    %v665 = vpack.c.bf16 %v662, %v661
    %v666 = vpack.c.bf16 %v663, %v663
    %v667 = vld [vmem:[#allocation2 + $0x1] sm:$0xff]
    %v668 = vld [vmem:[#allocation2 + $0x9] sm:$0xff]
    %v669 = vld [vmem:[#allocation2 + $0x11] sm:$0xff]
    %v670 = vld [vmem:[#allocation2 + $0x19] sm:$0xff]
    %v671 = vld [vmem:[#allocation2 + $0x21] sm:$0xff]
    %v672 = vpack.c.bf16 %v668, %v667
    %v673 = vpack.c.bf16 %v670, %v669
    %v674 = vpack.c.bf16 %v671, %v671
    %v675 = vld [vmem:[#allocation2 + $0x2] sm:$0xff]
    %v676 = vld [vmem:[#allocation2 + $0xa] sm:$0xff]
    %v677 = vld [vmem:[#allocation2 + $0x12] sm:$0xff]
    %v678 = vld [vmem:[#allocation2 + $0x1a] sm:$0xff]
    %v679 = vld [vmem:[#allocation2 + $0x22] sm:$0xff]
    %v680 = vpack.c.bf16 %v676, %v675
    %v681 = vpack.c.bf16 %v678, %v677
    %v682 = vpack.c.bf16 %v679, %v679
    %v683 = vld [vmem:[#allocation2 + $0x3] sm:$0xff]
    %v684 = vld [vmem:[#allocation2 + $0xb] sm:$0xff]
    %v685 = vld [vmem:[#allocation2 + $0x13] sm:$0xff]
    %v686 = vld [vmem:[#allocation2 + $0x1b] sm:$0xff]
    %v687 = vld [vmem:[#allocation2 + $0x23] sm:$0xff]
    %v688 = vpack.c.bf16 %v684, %v683
    %v689 = vpack.c.bf16 %v686, %v685
    %v690 = vpack.c.bf16 %v687, %v687
    %v691 = vld [vmem:[#allocation2 + $0x4] sm:$0xff]
    %v692 = vld [vmem:[#allocation2 + $0xc] sm:$0xff]
    %v693 = vld [vmem:[#allocation2 + $0x14] sm:$0xff]
    %v694 = vld [vmem:[#allocation2 + $0x1c] sm:$0xff]
    %v695 = vld [vmem:[#allocation2 + $0x24] sm:$0xff]
    %v696 = vpack.c.bf16 %v692, %v691
    %v697 = vpack.c.bf16 %v694, %v693
    %v698 = vpack.c.bf16 %v695, %v695
    %v699 = vld [vmem:[#allocation6] sm:$0xf]
    %v700 = vld [vmem:[#allocation6 + $0x4] sm:$0xf]
    %v701 = vld [vmem:[#allocation6 + $0x8] sm:$0xf]
    %v702 = vld [vmem:[#allocation6 + $0xc] sm:$0xf]
    %v703 = vld [vmem:[#allocation6 + $0x10] sm:$0xf]
    %v704 = vld [vmem:[#allocation6 + $0x14] sm:$0xf]
    %v705 = vld [vmem:[#allocation6 + $0x18] sm:$0xf]
    %v706 = vld [vmem:[#allocation6 + $0x1c] sm:$0xf]
    %v707 = vld [vmem:[#allocation6 + $0x20] sm:$0xf]
    %v708 = vld [vmem:[#allocation6 + $0x24] sm:$0xf]
    %v709 = vld [vmem:[#allocation6 + $0x28] sm:$0xf]
    %v710 = vld [vmem:[#allocation6 + $0x2c] sm:$0xf]
    %v711 = vld [vmem:[#allocation6 + $0x30] sm:$0xf]
    %v712 = vld [vmem:[#allocation6 + $0x34] sm:$0xf]
    %v713 = vld [vmem:[#allocation6 + $0x38] sm:$0xf]
    %v714 = vld [vmem:[#allocation6 + $0x3c] sm:$0xf]
    %v715 = vld [vmem:[#allocation6 + $0x40] sm:$0xf]
    %v716 = vld [vmem:[#allocation6 + $0x44] sm:$0xf]
    %v717 = vld [vmem:[#allocation6 + $0x48] sm:$0xf]
    %v718 = vld [vmem:[#allocation6 + $0x4c] sm:$0xf]
    %v719 = vld [vmem:[#allocation6 + $0x50] sm:$0xf]
    %v720 = vld [vmem:[#allocation6 + $0x54] sm:$0xf]
    %v721 = vld [vmem:[#allocation6 + $0x58] sm:$0xf]
    %v722 = vld [vmem:[#allocation6 + $0x5c] sm:$0xf]
    %v723 = vld [vmem:[#allocation6 + $0x60] sm:$0xf]
    %v724 = vld [vmem:[#allocation6 + $0x64] sm:$0xf]
    %v725 = vld [vmem:[#allocation6 + $0x68] sm:$0xf]
    %v726 = vld [vmem:[#allocation6 + $0x6c] sm:$0xf]
    %v727 = vld [vmem:[#allocation6 + $0x70] sm:$0xf]
    %v728 = vld [vmem:[#allocation6 + $0x74] sm:$0xf]
    %v729 = vld [vmem:[#allocation6 + $0x78] sm:$0xf]
    %v730 = vld [vmem:[#allocation6 + $0x7c] sm:$0xf]
    %v731 = vld [vmem:[#allocation6 + $0x80] sm:$0xf]
    %v732 = vld [vmem:[#allocation6 + $0x84] sm:$0xf]
    %v733 = vld [vmem:[#allocation6 + $0x88] sm:$0xf]
    %v734 = vld [vmem:[#allocation6 + $0x8c] sm:$0xf]
    %v735 = vld [vmem:[#allocation6 + $0x90] sm:$0xf]
    %v736 = vld [vmem:[#allocation6 + $0x94] sm:$0xf]
    %v737 = vld [vmem:[#allocation6 + $0x98] sm:$0xf]
    %v738 = vld [vmem:[#allocation6 + $0x9c] sm:$0xf]
    %v739 = vld [vmem:[#allocation6 + $0xa0] sm:$0xf]
    %v740 = vld [vmem:[#allocation6 + $0xa4] sm:$0xf]
    %v741 = vld [vmem:[#allocation6 + $0xa8] sm:$0xf]
    %v742 = vld [vmem:[#allocation6 + $0xac] sm:$0xf]
    %v743 = vld [vmem:[#allocation6 + $0xb0] sm:$0xf]
    %v744 = vld [vmem:[#allocation6 + $0xb4] sm:$0xf]
    %v745 = vld [vmem:[#allocation6 + $0xb8] sm:$0xf]
    %v746 = vld [vmem:[#allocation6 + $0xbc] sm:$0xf]
    %v747 = vld [vmem:[#allocation6 + $0xc0] sm:$0xf]
    %v748 = vld [vmem:[#allocation6 + $0xc4] sm:$0xf]
    %v749 = vld [vmem:[#allocation6 + $0xc8] sm:$0xf]
    %v750 = vld [vmem:[#allocation6 + $0xcc] sm:$0xf]
    %v751 = vld [vmem:[#allocation6 + $0xd0] sm:$0xf]
    %v752 = vld [vmem:[#allocation6 + $0xd4] sm:$0xf]
    %v753 = vld [vmem:[#allocation6 + $0xd8] sm:$0xf]
    %v754 = vld [vmem:[#allocation6 + $0xdc] sm:$0xf]
    %v755 = vld [vmem:[#allocation6 + $0xe0] sm:$0xf]
    %v756 = vld [vmem:[#allocation6 + $0xe4] sm:$0xf]
    %v757 = vld [vmem:[#allocation6 + $0xe8] sm:$0xf]
    %v758 = vld [vmem:[#allocation6 + $0xec] sm:$0xf]
    %v759 = vld [vmem:[#allocation6 + $0xf0] sm:$0xf]
    %v760 = vld [vmem:[#allocation6 + $0xf4] sm:$0xf]
    %v761 = vld [vmem:[#allocation6 + $0xf8] sm:$0xf]
    %v762 = vld [vmem:[#allocation6 + $0xfc] sm:$0xf]
    %v763 = vld [vmem:[#allocation6 + $0x100] sm:$0xf]
    %v764 = vld [vmem:[#allocation6 + $0x104] sm:$0xf]
    %v765 = vld [vmem:[#allocation6 + $0x108] sm:$0xf]
    %v766 = vld [vmem:[#allocation6 + $0x10c] sm:$0xf]
    %v767 = vld [vmem:[#allocation6 + $0x110] sm:$0xf]
    %v768 = vld [vmem:[#allocation6 + $0x114] sm:$0xf]
    %v769 = vld [vmem:[#allocation6 + $0x118] sm:$0xf]
    %v770 = vld [vmem:[#allocation6 + $0x11c] sm:$0xf]
    %v771 = vld [vmem:[#allocation6 + $0x120] sm:$0xf]
    %v772 = vld [vmem:[#allocation6 + $0x124] sm:$0xf]
    %v773 = vld [vmem:[#allocation6 + $0x128] sm:$0xf]
    %v774 = vld [vmem:[#allocation6 + $0x12c] sm:$0xf]
    %v775 = vld [vmem:[#allocation6 + $0x130] sm:$0xf]
    %v776 = vld [vmem:[#allocation6 + $0x134] sm:$0xf]
    %v777 = vld [vmem:[#allocation6 + $0x138] sm:$0xf]
    %v778 = vld [vmem:[#allocation6 + $0x13c] sm:$0xf]
    %v779 = vld [vmem:[%s5] sm:$0x1]
    %v781 = vlaneseq
    %v782 = vshrl.u32 %v781, 7
    %v783 = vsub.s32 0, %v782
    %v784 = vrot.slane %v779, %v783
    %v866 = vunpack.c.l.b16 %v699
    %v867 = vunpack.c.l.b16 %v700
    %v868 = vunpack.c.l.b16 %v701
    %v869 = vunpack.c.l.b16 %v702
    %v870 = vunpack.c.l.b16 %v703
    %v871 = vunpack.c.l.b16 %v704
    %v872 = vunpack.c.l.b16 %v705
    %v873 = vunpack.c.l.b16 %v706
    %v874 = vunpack.c.l.b16 %v707
    %v875 = vunpack.c.l.b16 %v708
    %v876 = vunpack.c.l.b16 %v709
    %v877 = vunpack.c.l.b16 %v710
    %v878 = vunpack.c.l.b16 %v711
    %v879 = vunpack.c.l.b16 %v712
    %v880 = vunpack.c.l.b16 %v713
    %v881 = vunpack.c.l.b16 %v714
    %v882 = vunpack.c.l.b16 %v715
    %v883 = vunpack.c.l.b16 %v716
    %v884 = vunpack.c.l.b16 %v717
    %v885 = vunpack.c.l.b16 %v718
    %v886 = vunpack.c.l.b16 %v719
    %v887 = vunpack.c.l.b16 %v720
    %v888 = vunpack.c.l.b16 %v721
    %v889 = vunpack.c.l.b16 %v722
    %v890 = vunpack.c.l.b16 %v723
    %v891 = vunpack.c.l.b16 %v724
    %v892 = vunpack.c.l.b16 %v725
    %v893 = vunpack.c.l.b16 %v726
    %v894 = vunpack.c.l.b16 %v727
    %v895 = vunpack.c.l.b16 %v728
    %v896 = vunpack.c.l.b16 %v729
    %v897 = vunpack.c.l.b16 %v730
    %v898 = vunpack.c.l.b16 %v731
    %v899 = vunpack.c.l.b16 %v732
    %v900 = vunpack.c.l.b16 %v733
    %v901 = vunpack.c.l.b16 %v734
    %v902 = vunpack.c.l.b16 %v735
    %v903 = vunpack.c.l.b16 %v736
    %v904 = vunpack.c.l.b16 %v737
    %v905 = vunpack.c.l.b16 %v738
    %v906 = vunpack.c.l.b16 %v739
    %v907 = vunpack.c.l.b16 %v740
    %v908 = vunpack.c.l.b16 %v741
    %v909 = vunpack.c.l.b16 %v742
    %v910 = vunpack.c.l.b16 %v743
    %v911 = vunpack.c.l.b16 %v744
    %v912 = vunpack.c.l.b16 %v745
    %v913 = vunpack.c.l.b16 %v746
    %v914 = vunpack.c.l.b16 %v747
    %v915 = vunpack.c.l.b16 %v748
    %v916 = vunpack.c.l.b16 %v749
    %v917 = vunpack.c.l.b16 %v750
    %v918 = vunpack.c.l.b16 %v751
    %v919 = vunpack.c.l.b16 %v752
    %v920 = vunpack.c.l.b16 %v753
    %v921 = vunpack.c.l.b16 %v754
    %v922 = vunpack.c.l.b16 %v755
    %v923 = vunpack.c.l.b16 %v756
    %v924 = vunpack.c.l.b16 %v757
    %v925 = vunpack.c.l.b16 %v758
    %v926 = vunpack.c.l.b16 %v759
    %v927 = vunpack.c.l.b16 %v760
    %v928 = vunpack.c.l.b16 %v761
    %v929 = vunpack.c.l.b16 %v762
    %v930 = vunpack.c.l.b16 %v763
    %v931 = vunpack.c.l.b16 %v764
    %v932 = vunpack.c.l.b16 %v765
    %v933 = vunpack.c.l.b16 %v766
    %v934 = vunpack.c.l.b16 %v767
    %v935 = vunpack.c.l.b16 %v768
    %v936 = vunpack.c.l.b16 %v769
    %v937 = vunpack.c.l.b16 %v770
    %v938 = vunpack.c.l.b16 %v771
    %v939 = vunpack.c.l.b16 %v772
    %v940 = vunpack.c.l.b16 %v773
    %v941 = vunpack.c.l.b16 %v774
    %v942 = vunpack.c.l.b16 %v775
    %v943 = vunpack.c.l.b16 %v776
    %v944 = vunpack.c.l.b16 %v777
    %v945 = vunpack.c.l.b16 %v778
    %v946 = vpack.c.b16 %v867, %v866
    %v947 = vpack.c.b16 %v869, %v868
    %v948 = vpack.c.b16 %v871, %v870
    %v949 = vpack.c.b16 %v873, %v872
    %v950 = vpack.c.b16 %v875, %v874
    %v951 = vpack.c.b16 %v877, %v876
    %v952 = vpack.c.b16 %v879, %v878
    %v953 = vpack.c.b16 %v881, %v880
    %v954 = vpack.c.b16 %v883, %v882
    %v955 = vpack.c.b16 %v885, %v884
    %v956 = vpack.c.b16 %v887, %v886
    %v957 = vpack.c.b16 %v889, %v888
    %v958 = vpack.c.b16 %v891, %v890
    %v959 = vpack.c.b16 %v893, %v892
    %v960 = vpack.c.b16 %v895, %v894
    %v961 = vpack.c.b16 %v897, %v896
    %v962 = vpack.c.b16 %v899, %v898
    %v963 = vpack.c.b16 %v901, %v900
    %v964 = vpack.c.b16 %v903, %v902
    %v965 = vpack.c.b16 %v905, %v904
    %v966 = vpack.c.b16 %v907, %v906
    %v967 = vpack.c.b16 %v909, %v908
    %v968 = vpack.c.b16 %v911, %v910
    %v969 = vpack.c.b16 %v913, %v912
    %v970 = vpack.c.b16 %v915, %v914
    %v971 = vpack.c.b16 %v917, %v916
    %v972 = vpack.c.b16 %v919, %v918
    %v973 = vpack.c.b16 %v921, %v920
    %v974 = vpack.c.b16 %v923, %v922
    %v975 = vpack.c.b16 %v925, %v924
    %v976 = vpack.c.b16 %v927, %v926
    %v977 = vpack.c.b16 %v929, %v928
    %v978 = vpack.c.b16 %v931, %v930
    %v979 = vpack.c.b16 %v933, %v932
    %v980 = vpack.c.b16 %v935, %v934
    %v981 = vpack.c.b16 %v937, %v936
    %v982 = vpack.c.b16 %v939, %v938
    %v983 = vpack.c.b16 %v941, %v940
    %v984 = vpack.c.b16 %v943, %v942
    %v985 = vpack.c.b16 %v945, %v944
    %1026 = vmatprep.subr.bf16.mxu0 0
    %1027 = vmatpush1.bf16.msra.mxu0 %v946
    %1028 = vmatprep.subr.bf16.mxu0 0
    %1029 = vmatpush1.bf16.msra.mxu0 %v947
    %1030 = vmatprep.subr.bf16.mxu0 0
    %1031 = vmatpush1.bf16.msra.mxu0 %v948
    %1032 = vmatprep.subr.bf16.mxu0 0
    %1033 = vmatpush1.bf16.msra.mxu0 %v949
    %1034 = vmatprep.subr.bf16.mxu0 0
    %1035 = vmatpush1.bf16.msra.mxu0 %v950
    %1036 = vmatprep.subr.bf16.mxu0 0
    %1037 = vmatpush1.bf16.msra.mxu0 %v951
    %1038 = vmatprep.subr.bf16.mxu0 0
    %1039 = vmatpush1.bf16.msra.mxu0 %v952
    %1040 = vmatprep.subr.bf16.mxu0 0
    %1041 = vmatpush1.bf16.msra.mxu0 %v953
    %1042 = vmatprep.subr.bf16.mxu0 0
    %1043 = vmatpush1.bf16.msra.mxu0 %v954
    %1044 = vmatprep.subr.bf16.mxu0 0
    %1045 = vmatpush1.bf16.msra.mxu0 %v955
    %1046 = vmatprep.subr.bf16.mxu0 0
    %1047 = vmatpush1.bf16.msra.mxu0 %v956
    %1048 = vmatprep.subr.bf16.mxu0 0
    %1049 = vmatpush1.bf16.msra.mxu0 %v957
    %1050 = vmatprep.subr.bf16.mxu0 0
    %1051 = vmatpush1.bf16.msra.mxu0 %v958
    %1052 = vmatprep.subr.bf16.mxu0 0
    %1053 = vmatpush1.bf16.msra.mxu0 %v959
    %1054 = vmatprep.subr.bf16.mxu0 0
    %1055 = vmatpush1.bf16.msra.mxu0 %v960
    %1056 = vmatprep.subr.bf16.mxu0 0
    %1057 = vmatpush1.bf16.msra.mxu0 %v961
    %1058 = vmatprep.mubr.bf16.mxu0 %v672
    %1059 = vmatmul.mubr.bf16.gmra.mrb[0].mxu0 %v664
    %v1060 = vpop.f32.mrb[0].mxu0
    %v1061 = vadd.f32 %v784, %v1060
    %v1062 = vpop.f32.mrb[0].mxu0
    %v1063 = vpop.f32.mrb[0].mxu0
    %v1064 = vadd.f32 %v784, %v1063
    %v1065 = vpop.f32.mrb[0].mxu0
    %1066 = vmatprep.mubr.bf16.mxu0 %v673
    %1067 = vmatmul.mubr.bf16.gmra.mrb[0].mxu0 %v665
    %v1068 = vpop.f32.mrb[0].mxu0
    %v1069 = vpop.f32.mrb[0].mxu0
    %v1070 = vpop.f32.mrb[0].mxu0
    %v1071 = vadd.f32 %v784, %v1070
    %v1072 = vpop.f32.mrb[0].mxu0
    %1073 = vmatprep.mubr.bf16.mxu0 %v674
    %1074 = vmatmul.mubr.bf16.gmra.mrb[0].mxu0 %v666
    %v1075 = vpop.f32.mrb[0].mxu0
    %v1076 = vadd.f32 %v784, %v1075
    %v1077 = vpop.f32.mrb[0].mxu0
    %v1078 = vpop.f32.mrb[0].mxu0
    %v1079 = vpop.f32.mrb[0].mxu0
    %1080 = vdwg.mxu0
    %1081 = vmatprep.subr.bf16.mxu0 0
    %1082 = vmatpush1.bf16.msra.mxu0 %v962
    %1083 = vmatprep.subr.bf16.mxu0 0
    %1084 = vmatpush1.bf16.msra.mxu0 %v963
    %1085 = vmatprep.subr.bf16.mxu0 0
    %1086 = vmatpush1.bf16.msra.mxu0 %v964
    %1087 = vmatprep.subr.bf16.mxu0 0
    %1088 = vmatpush1.bf16.msra.mxu0 %v965
    %1089 = vmatprep.subr.bf16.mxu0 0
    %1090 = vmatpush1.bf16.msra.mxu0 %v966
    %1091 = vmatprep.subr.bf16.mxu0 0
    %1092 = vmatpush1.bf16.msra.mxu0 %v967
    %1093 = vmatprep.subr.bf16.mxu0 0
    %1094 = vmatpush1.bf16.msra.mxu0 %v968
    %1095 = vmatprep.subr.bf16.mxu0 0
    %1096 = vmatpush1.bf16.msra.mxu0 %v969
    %1097 = vmatprep.subr.bf16.mxu0 0
    %1098 = vmatpush1.bf16.msra.mxu0 %v970
    %1099 = vmatprep.subr.bf16.mxu0 0
    %1100 = vmatpush1.bf16.msra.mxu0 %v971
    %1101 = vmatprep.subr.bf16.mxu0 0
    %1102 = vmatpush1.bf16.msra.mxu0 %v972
    %1103 = vmatprep.subr.bf16.mxu0 0
    %1104 = vmatpush1.bf16.msra.mxu0 %v973
    %1105 = vmatprep.subr.bf16.mxu0 0
    %1106 = vmatpush1.bf16.msra.mxu0 %v974
    %1107 = vmatprep.subr.bf16.mxu0 0
    %1108 = vmatpush1.bf16.msra.mxu0 %v975
    %1109 = vmatprep.subr.bf16.mxu0 0
    %1110 = vmatpush1.bf16.msra.mxu0 %v976
    %1111 = vmatprep.subr.bf16.mxu0 0
    %1112 = vmatpush1.bf16.msra.mxu0 %v977
    %1113 = vmatprep.mubr.bf16.mxu0 %v688
    %1114 = vmatmul.mubr.bf16.gmra.mrb[0].mxu0 %v680
    %v1115 = vpop.f32.mrb[0].mxu0
    %v1116 = vadd.f32 %v1061, %v1115
    %v1117 = vpop.f32.mrb[0].mxu0
    %v1118 = vpop.f32.mrb[0].mxu0
    %v1119 = vadd.f32 %v1064, %v1118
    %v1120 = vpop.f32.mrb[0].mxu0
    %1121 = vmatprep.mubr.bf16.mxu0 %v689
    %1122 = vmatmul.mubr.bf16.gmra.mrb[0].mxu0 %v681
    %v1123 = vpop.f32.mrb[0].mxu0
    %v1124 = vpop.f32.mrb[0].mxu0
    %v1125 = vpop.f32.mrb[0].mxu0
    %v1126 = vadd.f32 %v1071, %v1125
    %v1127 = vpop.f32.mrb[0].mxu0
    %1128 = vmatprep.mubr.bf16.mxu0 %v690
    %1129 = vmatmul.mubr.bf16.gmra.mrb[0].mxu0 %v682
    %v1130 = vpop.f32.mrb[0].mxu0
    %v1131 = vadd.f32 %v1076, %v1130
    %v1132 = vpop.f32.mrb[0].mxu0
    %v1133 = vpop.f32.mrb[0].mxu0
    %v1134 = vpop.f32.mrb[0].mxu0
    %1135 = vdwg.mxu0
    %1136 = vmatprep.subr.bf16.mxu0 0
    %1137 = vmatpush1.bf16.msra.mxu0 %v978
    %1138 = vmatprep.subr.bf16.mxu0 0
    %1139 = vmatpush1.bf16.msra.mxu0 %v979
    %1140 = vmatprep.subr.bf16.mxu0 0
    %1141 = vmatpush1.bf16.msra.mxu0 %v980
    %1142 = vmatprep.subr.bf16.mxu0 0
    %1143 = vmatpush1.bf16.msra.mxu0 %v981
    %1144 = vmatprep.subr.bf16.mxu0 0
    %1145 = vmatpush1.bf16.msra.mxu0 %v982
    %1146 = vmatprep.subr.bf16.mxu0 0
    %1147 = vmatpush1.bf16.msra.mxu0 %v983
    %1148 = vmatprep.subr.bf16.mxu0 0
    %1149 = vmatpush1.bf16.msra.mxu0 %v984
    %1150 = vmatprep.subr.bf16.mxu0 0
    %1151 = vmatpush1.bf16.msra.mxu0 %v985
    %1152 = vmatprep.subr.bf16.mxu0 0
    %1153 = vmatpush1.bf16.msra.mxu0 0
    %1154 = vmatprep.subr.bf16.mxu0 0
    %1155 = vmatpush1.bf16.msra.mxu0 0
    %1156 = vmatprep.subr.bf16.mxu0 0
    %1157 = vmatpush1.bf16.msra.mxu0 0
    %1158 = vmatprep.subr.bf16.mxu0 0
    %1159 = vmatpush1.bf16.msra.mxu0 0
    %1160 = vmatprep.subr.bf16.mxu0 0
    %1161 = vmatpush1.bf16.msra.mxu0 0
    %1162 = vmatprep.subr.bf16.mxu0 0
    %1163 = vmatpush1.bf16.msra.mxu0 0
    %1164 = vmatprep.subr.bf16.mxu0 0
    %1165 = vmatpush1.bf16.msra.mxu0 0
    %1166 = vmatprep.subr.bf16.mxu0 0
    %1167 = vmatpush1.bf16.msra.mxu0 0
    %1168 = vmatprep.mubr.bf16.mxu0 0
    %1169 = vmatmul.mubr.bf16.gmra.mrb[0].mxu0 %v696
    %v1170 = vpop.f32.mrb[0].mxu0
    %v1171 = vadd.f32 %v1116, %v1170
    %v1172 = vpop.f32.mrb[0].mxu0
    %v1173 = vpop.f32.mrb[0].mxu0
    %v1174 = vadd.f32 %v1119, %v1173
    %v1175 = vpop.f32.mrb[0].mxu0
    %1176 = vmatprep.mubr.bf16.mxu0 0
    %1177 = vmatmul.mubr.bf16.gmra.mrb[0].mxu0 %v697
    %v1178 = vpop.f32.mrb[0].mxu0
    %v1179 = vpop.f32.mrb[0].mxu0
    %v1180 = vpop.f32.mrb[0].mxu0
    %v1181 = vadd.f32 %v1126, %v1180
    %v1182 = vpop.f32.mrb[0].mxu0
    %1183 = vmatprep.mubr.bf16.mxu0 0
    %1184 = vmatmul.mubr.bf16.gmra.mrb[0].mxu0 %v698
    %v1185 = vpop.f32.mrb[0].mxu0
    %v1186 = vadd.f32 %v1131, %v1185
    %v1187 = vpop.f32.mrb[0].mxu0
    %v1188 = vpop.f32.mrb[0].mxu0
    %v1189 = vpop.f32.mrb[0].mxu0
    %1190 = vdwg.mxu0
    %v1191 = vld [vmem:[%s1] sm:$0xff]
    %v1192 = vld [vmem:[%s1 + $0x8] sm:$0xff]
    %1194 = vset.pattern.permute.xlu0 0
    %1195 = vperm.xlu0 %1194, %v1191
    %v1196 = vpop.permute.xlu0 %1195
    %1199 = vset.pattern.permute.xlu0 0
    %1200 = vperm.xlu0 %1199, %v1192
    %v1201 = vpop.permute.xlu0 %1200
    %v1203 = vmul.f32 %v1171, %v1196
    %v1204 = vmul.f32 %v1174, %v1201
    %1205 = vst [vmem:[#allocation8] sm:$0xff] %v1203
    %1206 = vst [vmem:[#allocation8 + $0x8] sm:$0xff] %v1204
    %v1207 = vld [vmem:[%s78] sm:$0xff]
    %v1208 = vld [vmem:[%s78 + $0x8] sm:$0xff]
    %1210 = vset.pattern.permute.xlu0 0
    %1211 = vperm.xlu0 %1210, %v1207
    %v1212 = vpop.permute.xlu0 %1211
    %1215 = vset.pattern.permute.xlu0 0
    %1216 = vperm.xlu0 %1215, %v1208
    %v1217 = vpop.permute.xlu0 %1216
    %v1219 = vmul.f32 %v1181, %v1212
    %v1220 = vmul.f32 %v1186, %v1217
    %s1221 = scalar_lea.vmem [#allocation8], 16
    %1222 = vst [vmem:[%s1221] sm:$0xff] %v1219
    %1223 = vst [vmem:[%s1221 + $0x8] sm:$0xff] %v1220
    // Predicated region
    $region34: #{tpu_custom_call.1} parent=1 // pred_check
      _
    $region35: #{tpu_custom_call.1} parent=1 // pred_check_branch
      %1225 = sbr.rel (0) target = $region37
    $region36: #{tpu_custom_call.1} parent=1 // pred_region
      %s1227 = ssub.s32 512, 512
      %1228 = vsyncadd [#allocation5], %s1227
      %s1229 = sshll.u32 [#allocation8], 4
      %s1230 = int_to_ptr.vmem [resolvable:$true] %s1229
      %1235 = dma.vmem_to_hbm [thread:$0]  %s1230, 512, %s6, [#allocation5], 128, 128, 8
    $region37: #{tpu_custom_call.1} parent=1 // pred_fallthru
      _
    // Predicated region
    $region38: #{tpu_custom_call.1} parent=1 // pred_check
      _
    $region39: #{tpu_custom_call.1} parent=1 // pred_check_branch
      %1237 = sbr.rel (0) target = $region41
    $region40: #{tpu_custom_call.1} parent=1 // pred_region
      %1238 = dma.done [#allocation5], 512
    $region41: #{tpu_custom_call.1} parent=1 // pred_fallthru
      _
    %1239 = vsyncpa [#allocation4], 1
    %1240 = vsyncpa [#allocation7], 1
    %1241 = vsyncpa [#allocation5], 1

</llo_original>
